<compile_context>
chip_gen: v5e
topology: v5e:2x2
jax: 0.10.0
libtpu: 0.0.40
codegen_flags: <defaults>
</compile_context>

<pallas_src>
import functools

import jax
import jax.numpy as jnp
from jax.experimental import pallas as pl
from jax.experimental.pallas import tpu as pltpu


def _round_up(n, m):
    return ((n + m - 1) // m) * m


def _flinear_kernel(x_ref, ws_ref, c_ref, bm_ref, o_ref):
    # x_ref:  (TB, in_dim)  VMEM  batch tile (row-major, as stored in HBM)
    # ws_ref: (BP, in_dim)  VMEM  basis rows padded to a multiple of 8; pad rows = 0
    # c_ref:  (BP, 2)       VMEM  col 0 = b_s + phi (phase-folded bias), col 1 = amplitude A
    # bm_ref: (1,)          SMEM  final scalar bias
    # o_ref:  (1, TB)       VMEM  lane-dense output row
    x = x_ref[...].astype(jnp.float32)
    w = ws_ref[...]
    c = c_ref[...]

    # Stage 1 on the MXU in transposed orientation:
    #   s^T = W_s @ x^T  -> (BP, TB): basis on sublanes, batch on lanes.
    st = jax.lax.dot_general(
        w, x, (((1,), (1,)), ((), ())), preferred_element_type=jnp.float32
    )
    st = st + c[:, 0:1]                      # phase-folded bias (lane broadcast)

    # Stage 2 on VPU/EUP: one sin + one multiply per basis element (lane-dense),
    # then a <=8-row sublane reduction.  Padded basis rows have amplitude 0.
    contrib = c[:, 1:2] * jnp.sin(st)        # (BP, TB)
    y = jnp.sum(contrib, axis=0, keepdims=True) + bm_ref[0]   # (1, TB)
    o_ref[...] = y.astype(o_ref.dtype)


@functools.partial(jax.jit, static_argnames=("out_dim", "tile_b"))
def flinear_forward(x, w_s, b_s, w_m, b_m, *, out_dim, tile_b=4096):
    """x: (B, in_dim); torch-layout params:
       w_s: (basis_dim, in_dim), b_s: (basis_dim,)
       w_m: (1, 2*basis_dim),    b_m: (1,)
    Returns (B, out_dim) float32, matching Flinear.forward.
    """
    B, in_dim = x.shape
    basis_dim = w_s.shape[0]
    BP = _round_up(basis_dim, 8)             # basis padded onto sublanes

    # --- parameter prep (amplitude-phase rewrite, phase folded into bias) ---
    w_s = jnp.asarray(w_s, jnp.float32)
    b_s = jnp.asarray(b_s, jnp.float32)
    wm = jnp.asarray(w_m, jnp.float32).reshape(2 * basis_dim)
    w_sin = wm[:basis_dim]
    w_cos = wm[basis_dim:]
    amp = jnp.sqrt(w_sin * w_sin + w_cos * w_cos)          # A
    phi = jnp.arctan2(w_cos, w_sin)                        # phase
    b_eff = b_s + phi                                      # fold phase into bias

    ws_pad = jnp.zeros((BP, in_dim), jnp.float32).at[:basis_dim, :].set(w_s)
    consts = jnp.zeros((BP, 2), jnp.float32)
    consts = consts.at[:basis_dim, 0].set(b_eff)
    consts = consts.at[:basis_dim, 1].set(amp)             # padded rows: A = 0
    bm1 = jnp.asarray(b_m, jnp.float32).reshape(1)         # SMEM scalar

    # --- batch tiling: big lane-aligned tiles; small batches -> single tile ---
    R = _round_up(B, 8)
    tile_b = max(128, _round_up(int(tile_b), 128))
    if R <= tile_b:
        tb = R                                # single tile; block == full array
        B_pad = R
    else:
        tb = tile_b                           # multiple of 128 -> dense stores
        B_pad = _round_up(B, tb)              # grid >= 2 here (helps v7x 2-TC)
    x_pad = x if B_pad == B else jnp.pad(x, ((0, B_pad - B), (0, 0)))

    grid = (B_pad // tb,)

    cost = pl.CostEstimate(
        flops=int(2 * BP * in_dim * B_pad + 4 * BP * B_pad),
        transcendentals=int(BP * B_pad),
        bytes_accessed=int(4 * (B_pad * in_dim + B_pad + BP * in_dim + 2 * BP + 1)),
    )

    y_row = pl.pallas_call(
        _flinear_kernel,
        out_shape=jax.ShapeDtypeStruct((1, B_pad), jnp.float32),
        grid_spec=pltpu.PrefetchScalarGridSpec(
            num_scalar_prefetch=0,
            grid=grid,
            in_specs=[
                pl.BlockSpec((tb, in_dim), lambda i: (i, 0)),
                pl.BlockSpec((BP, in_dim), lambda i: (0, 0)),
                pl.BlockSpec((BP, 2), lambda i: (0, 0)),
                pl.BlockSpec(memory_space=pltpu.MemorySpace.SMEM),
            ],
            out_specs=pl.BlockSpec((1, tb), lambda i: (0, i)),
        ),
        compiler_params=pltpu.CompilerParams(
            dimension_semantics=("parallel",),
        ),
        cost_estimate=cost,
    )(x_pad, ws_pad, consts, bm1)

    y_col = y_row[0, :B, None]                              # (B, 1)
    # All out_dim Fmap copies share parameters -> identical columns.  The
    # broadcast is materialized only to match Flinear.forward's (B, out_dim)
    # contract; consumers that can take the (B, 1) column should use y_col.
    return jnp.broadcast_to(y_col, (B, out_dim))


def flinear_reference(x, w_s, b_s, w_m, b_m, out_dim):
    """Pure-JAX reference following the torch code literally."""
    s = x @ w_s.T + b_s
    f = jnp.concatenate([jnp.sin(s), jnp.cos(s)], axis=-1)
    y = f @ w_m.T + b_m                      # (..., 1)
    return jnp.concatenate([y] * out_dim, axis=-1)


if __name__ == "__main__":
    # Small shapes consistent with the module.
    in_dim, out_dim, basis_dim = 32, 16, 7
    batch = 16

    key = jax.random.PRNGKey(0)
    kx, k1, k2, k3, k4 = jax.random.split(key, 5)

    # Deterministic param init (PyTorch Linear-style uniform bounds).
    bound_s = 1.0 / (in_dim ** 0.5)
    w_s = jax.random.uniform(k1, (basis_dim, in_dim), jnp.float32, -bound_s, bound_s)
    b_s = jax.random.uniform(k2, (basis_dim,), jnp.float32, -bound_s, bound_s)
    bound_m = 1.0 / ((2 * basis_dim) ** 0.5)
    w_m = jax.random.uniform(k3, (1, 2 * basis_dim), jnp.float32, -bound_m, bound_m)
    b_m = jax.random.uniform(k4, (1,), jnp.float32, -bound_m, bound_m)

    x = jax.random.normal(kx, (batch, in_dim), jnp.float32)

    out = flinear_forward(x, w_s, b_s, w_m, b_m, out_dim=out_dim)
    out = jax.block_until_ready(out)

    ref = flinear_reference(x, w_s, b_s, w_m, b_m, out_dim)
    assert out.shape == (batch, out_dim), out.shape
    assert jnp.allclose(out, ref, atol=2e-5, rtol=1e-5), float(
        jnp.max(jnp.abs(out - ref))
    )

    # Ragged / larger batch: exercises padding and the multi-tile (grid > 1) path.
    x_big = jax.random.normal(kx, (9000, in_dim), jnp.float32)
    out_big = jax.block_until_ready(
        flinear_forward(x_big, w_s, b_s, w_m, b_m, out_dim=out_dim, tile_b=4096)
    )
    ref_big = flinear_reference(x_big, w_s, b_s, w_m, b_m, out_dim)
    assert jnp.allclose(out_big, ref_big, atol=2e-5, rtol=1e-5), float(
        jnp.max(jnp.abs(out_big - ref_big))
    )

    print("KERNEL_OK")
</pallas_src>

<mosaic_0001>
module attributes {stable_mosaic.version = 11 : i64} {
  func.func @_flinear_kernel(%arg0: i32, %arg1: memref<16x32xf32, #tpu.memory_space<vmem>>, %arg2: memref<8x32xf32, #tpu.memory_space<vmem>>, %arg3: memref<8x2xf32, #tpu.memory_space<vmem>>, %arg4: memref<1xf32, #tpu.memory_space<smem>>, %arg5: memref<1x16xf32, #tpu.memory_space<vmem>>) attributes {dimension_semantics = [#tpu.dimension_semantics<parallel>], iteration_bounds = array<i64: 1>, scalar_prefetch = 0 : i64, scratch_operands = 0 : i64, tpu.core_type = #tpu.core_type<tc>, window_params = [{transform_indices = @transform_0, window_bounds = array<i64: 16, 32>}, {pipeline_mode = #tpu.pipeline_mode<synchronous>, transform_indices = @transform_1, window_bounds = array<i64: 8, 32>}, {pipeline_mode = #tpu.pipeline_mode<synchronous>, transform_indices = @transform_2, window_bounds = array<i64: 8, 2>}, {transform_indices = @transform_3, window_bounds = array<i64: 1>}, {transform_indices = @transform_4, window_bounds = array<i64: 1, 16>}]} {
    %c0 = arith.constant 0 : index
    %c0_0 = arith.constant 0 : index
    %0 = vector.load %arg1[%c0, %c0_0] : memref<16x32xf32, #tpu.memory_space<vmem>>, vector<16x32xf32>
    %c0_1 = arith.constant 0 : index
    %c0_2 = arith.constant 0 : index
    %1 = vector.load %arg2[%c0_1, %c0_2] : memref<8x32xf32, #tpu.memory_space<vmem>>, vector<8x32xf32>
    %c0_3 = arith.constant 0 : index
    %c0_4 = arith.constant 0 : index
    %2 = vector.load %arg3[%c0_3, %c0_4] : memref<8x2xf32, #tpu.memory_space<vmem>>, vector<8x2xf32>
    %cst = arith.constant dense<0.000000e+00> : vector<8x16xf32>
    %3 = tpu.matmul %1, %0, %cst {dimension_numbers = #tpu.dot_dimension_numbers<[1], [1], [0], [0], [0, 0, 1, 0], [], []>} : vector<8x32xf32>, vector<16x32xf32>, vector<8x16xf32> -> vector<8x16xf32>
    %4 = vector.extract_strided_slice %2 {offsets = [0, 0], sizes = [8, 1], strides = [1, 1]} : vector<8x2xf32> to vector<8x1xf32>
    %5 = vector.broadcast %4 : vector<8x1xf32> to vector<8x16xf32>
    %6 = arith.addf %3, %5 : vector<8x16xf32>
    %7 = vector.extract_strided_slice %2 {offsets = [0, 1], sizes = [8, 1], strides = [1, 1]} : vector<8x2xf32> to vector<8x1xf32>
    %8 = math.sin %6 : vector<8x16xf32>
    %9 = vector.broadcast %7 : vector<8x1xf32> to vector<8x16xf32>
    %10 = arith.mulf %9, %8 : vector<8x16xf32>
    %cst_5 = arith.constant dense<0.000000e+00> : vector<16xf32>
    %11 = vector.multi_reduction <add>, %10, %cst_5 [0] : vector<8x16xf32> to vector<16xf32>
    %12 = vector.shape_cast %11 : vector<16xf32> to vector<1x16xf32>
    %c0_6 = arith.constant 0 : index
    %13 = memref.load %arg4[%c0_6] : memref<1xf32, #tpu.memory_space<smem>>
    %14 = vector.broadcast %13 : f32 to vector<1x16xf32>
    %15 = arith.addf %12, %14 : vector<1x16xf32>
    %c0_7 = arith.constant 0 : index
    %c0_8 = arith.constant 0 : index
    %16 = vector.load %arg5[%c0_7, %c0_8] : memref<1x16xf32, #tpu.memory_space<vmem>>, vector<1x16xf32>
    tpu.vector_store %arg5[%c0_7, %c0_8], %15 {strides = array<i32>} : memref<1x16xf32, #tpu.memory_space<vmem>>, vector<1x16xf32>,
    return
  }
  func.func @transform_0(%arg0: i32) -> (i32, i32) {
    %c0_i32 = arith.constant 0 : i32
    %c0_i32_0 = arith.constant 0 : i32
    return %arg0, %c0_i32 : i32, i32
  }
  func.func @transform_1(%arg0: i32) -> (i32, i32) {
    %c0_i32 = arith.constant 0 : i32
    %c0_i32_0 = arith.constant 0 : i32
    %c0_i32_1 = arith.constant 0 : i32
    return %c0_i32, %c0_i32_0 : i32, i32
  }
  func.func @transform_2(%arg0: i32) -> (i32, i32) {
    %c0_i32 = arith.constant 0 : i32
    %c0_i32_0 = arith.constant 0 : i32
    %c0_i32_1 = arith.constant 0 : i32
    return %c0_i32, %c0_i32_0 : i32, i32
  }
  func.func @transform_3(%arg0: i32) -> i32 {
    %c0_i32 = arith.constant 0 : i32
    %c0_i32_0 = arith.constant 0 : i32
    return %c0_i32 : i32
  }
  func.func @transform_4(%arg0: i32) -> (i32, i32) {
    %c0_i32 = arith.constant 0 : i32
    %c0_i32_0 = arith.constant 0 : i32
    return %c0_i32, %arg0 : i32, i32
  }
}

</mosaic_0001>

<llo_original>
// kernel: flinear_forward.1
$region0: #{flinear_forward.1}
  #allocation0 [shape = 'u32[]', space=smem, size = 0x4, offset = 0x4, fixed_abs, tag = 'smem constant byte address 0x4 - core index']
  #allocation1 [shape = 'u32[72,128]{1,0:T(1,128)}', space=vmem, size = 0x9000, scoped, tag = 'internal scratch']
  #allocation2 [shape = 'f32[1]{0:T(128)S(6)}', space=smem, size = 0x200, scoped, tag = 'scoped memory for flinear_forward.1']
  %s0 = inlined_call_operand.vmem [shape: f32[16,32], index: 0, kind: input, shape index: {}]
  %s1 = inlined_call_operand.vmem [shape: f32[8,32], index: 1, kind: input, shape index: {}]
  %s2 = inlined_call_operand.vmem [shape: f32[8,2], index: 2, kind: input, shape index: {}]
  %s3 = inlined_call_operand.<no memory space> [shape: f32[1], index: 3, kind: input, shape index: {}]
  %s4 = inlined_call_operand.vmem [shape: f32[1,16], index: 4, kind: output, shape index: {}]
  %s5 = sld [smem:[#allocation0]]
  $region26: #{flinear_forward.1} parent=0
    _
  %s7 = ssub.s32 1, %s5
  %s8 = scalar_select 0, %s7, %s5
  %9 = sst [smem:[#allocation2]] %s3
  // Predicated region
  $region2: #{flinear_forward.1} parent=0 // pred_check
    _
  $region3: #{flinear_forward.1} parent=0 // pred_check_branch
    %11 = sbr.rel (0) target = $region5
  $region4: #{flinear_forward.1} parent=0 // pred_region
    _
  $region5: #{flinear_forward.1} parent=0 // pred_fallthru
    _
  // Predicated region
  $region6: #{flinear_forward.1} parent=0 // pred_check
    _
  $region7: #{flinear_forward.1} parent=0 // pred_check_branch
    %13 = sbr.rel (0) target = $region9
  $region8: #{flinear_forward.1} parent=0 // pred_region
    _
  $region9: #{flinear_forward.1} parent=0 // pred_fallthru
    _
  // Predicated region
  $region10: #{flinear_forward.1} parent=0 // pred_check
    _
  $region11: #{flinear_forward.1} parent=0 // pred_check_branch
    %15 = sbr.rel (0) target = $region13
  $region12: #{flinear_forward.1} parent=0 // pred_region
    _
  $region13: #{flinear_forward.1} parent=0 // pred_fallthru
    _
  // Predicated region
  $region14: #{flinear_forward.1} parent=0 // pred_check
    _
  $region15: #{flinear_forward.1} parent=0 // pred_check_branch
    %17 = sbr.rel (0) target = $region17
  $region16: #{flinear_forward.1} parent=0 // pred_region
    _
  $region17: #{flinear_forward.1} parent=0 // pred_fallthru
    _
  %v18 = vld [vmem:[%s0] sm:$0xff]
  %v19 = vld [vmem:[%s0 + $0x8] sm:$0xff]
  %v20 = vld [vmem:[%s1] sm:$0xff]
  %v21 = vld [vmem:[%s2] sm:$0xff]
  %23 = vset.pattern.permute.xlu0 0
  %24 = vperm.xlu0 %23, %v21
  %v25 = vpop.permute.xlu0 %24
  %vm27 = vcmask 261120
  %v29 = vsel %vm27, %v20, 0
  %v32 = vsel %vm27, %v18, 0
  %v35 = vsel %vm27, %v19, 0
  %37 = vmatpush.xpose.msra.mxu0 0.0
  %38 = vmatpush.xpose.msra.mxu0 0.0
  %39 = vmatpush.xpose.msra.mxu0 0.0
  %40 = vmatpush.xpose.msra.mxu0 0.0
  %41 = vmatpush.xpose.msra.mxu0 0.0
  %42 = vmatpush.xpose.msra.mxu0 0.0
  %43 = vmatpush.xpose.msra.mxu0 0.0
  %44 = vmatpush.xpose.msra.mxu0 0.0
  %45 = vmatpush.xpose.msra.mxu0 0.0
  %46 = vmatpush.xpose.msra.mxu0 0.0
  %47 = vmatpush.xpose.msra.mxu0 0.0
  %48 = vmatpush.xpose.msra.mxu0 0.0
  %49 = vmatpush.xpose.msra.mxu0 0.0
  %50 = vmatpush.xpose.msra.mxu0 0.0
  %51 = vmatpush.xpose.msra.mxu0 %v35
  %52 = vmatpush.xpose.msra.mxu0 %v32
  %53 = vmatmul.f32.gmra.mxu0 %v29
  %v54 = vpop.f32.mrf.mxu0
  %v55 = vadd.f32 %v25, %v54
  %56 = vdwg.mxu0
  %v57 = vand.u32 2147483647, %v55
  %vm58 = vcmp.le.f32.partialorder %v57, 0.7853982
  %vm59 = vcmp.lt.s32.totalorder %v55, 0
  %v60 = vand.u32 %v55, 2139095040
  %v61 = vshrl.u32 %v60, 23
  %v62 = vsub.s32 %v61, 127
  %v63 = vand.u32 2147483647, %v55
  %v64 = vand.u32 %v63, 8388607
  %v65 = vor.u32 %v64, 8388608
  %v66 = vsub.s32 0, %v65
  %v67 = vadd.s32 %v62, 1
  %vm68 = vcmp.gt.s32.totalorder %v67, 0
  %v69 = vsel %vm68, %v67, 0
  %v70 = vshrl.u32 %v69, 5
  %v71 = vand.u32 %v69, 31
  %v72 = vsub.s32 32, %v71
  %v73 = vshrl.u32 683565275, %v72
  %v74 = vshll.u32 683565275, %v71
  %v75 = vshrl.u32 2475754826, %v72
  %v76 = vor.u32 %v74, %v75
  %v77 = vshll.u32 2475754826, %v71
  %v78 = vshrl.u32 2131351028, %v72
  %v79 = vor.u32 %v77, %v78
  %v80 = vshll.u32 2131351028, %v71
  %v81 = vshrl.u32 2102212464, %v72
  %v82 = vor.u32 %v80, %v81
  %v83 = vshll.u32 2102212464, %v71
  %v84 = vshrl.u32 920167782, %v72
  %v85 = vor.u32 %v83, %v84
  %v86 = vshll.u32 920167782, %v71
  %v87 = vshrl.u32 1326507024, %v72
  %v88 = vor.u32 %v86, %v87
  %vm89 = vcmp.lt.s32.totalorder %v70, 1
  %vm90 = vcmp.lt.s32.totalorder %v70, 2
  %vm91 = vcmp.lt.s32.totalorder %v70, 3
  %vm92 = vcmp.lt.s32.totalorder %v70, 4
  %v93 = vsel %vm89, %v73, %v76
  %v94 = vsel %vm92, %v82, 2102212464
  %v95 = vsel %vm91, %v79, %v94
  %v96 = vsel %vm90, %v93, %v95
  %v97 = vsel %vm89, %v76, %v79
  %v98 = vsel %vm92, %v85, 920167782
  %v99 = vsel %vm91, %v82, %v98
  %v100 = vsel %vm90, %v97, %v99
  %v101 = vsel %vm89, %v79, %v82
  %v102 = vsel %vm92, %v88, 1326507024
  %v103 = vsel %vm91, %v85, %v102
  %v104 = vsel %vm90, %v101, %v103
  %v105 = vshll.u32 %v65, 8
  %v106 = vand.u32 %v105, 65535
  %v107 = vshrl.u32 %v105, 16
  %v108 = vand.u32 %v104, 65535
  %v109 = vshrl.u32 %v104, 16
  %v110 = vmul.u32 %v106, %v108
  %v111 = vmul.u32 %v106, %v109
  %v112 = vmul.u32 %v107, %v108
  %v113 = vmul.u32 %v107, %v109
  %v114 = vshll.u32 %v111, 16
  %v115 = vshrl.u32 %v111, 16
  %v116 = vshll.u32 %v112, 16
  %v117 = vshrl.u32 %v112, 16
  %vm118 = vc.u32 %v110, %v114
  %v119 = vsel %vm118, 1, 0
  %v120 = vadd.s32 %v110, %v114
  %v121 = vadd.s32 %v113, %v119
  %vm122 = vc.u32 %v120, %v116
  %v123 = vsel %vm122, 1, 0
  %v124 = vadd.s32 %v120, %v116
  %v125 = vadd.s32 %v121, %v123
  %v126 = vadd.s32 %v125, %v115
  %v127 = vadd.s32 %v126, %v117
  %v128 = vand.u32 %v105, 65535
  %v129 = vshrl.u32 %v105, 16
  %v130 = vand.u32 %v100, 65535
  %v131 = vshrl.u32 %v100, 16
  %v132 = vmul.u32 %v128, %v130
  %v133 = vmul.u32 %v128, %v131
  %v134 = vmul.u32 %v129, %v130
  %v135 = vmul.u32 %v129, %v131
  %v136 = vshll.u32 %v133, 16
  %v137 = vshrl.u32 %v133, 16
  %v138 = vshll.u32 %v134, 16
  %v139 = vshrl.u32 %v134, 16
  %vm140 = vc.u32 %v132, %v136
  %v141 = vsel %vm140, 1, 0
  %v142 = vadd.s32 %v132, %v136
  %v143 = vadd.s32 %v135, %v141
  %vm144 = vc.u32 %v142, %v138
  %v145 = vsel %vm144, 1, 0
  %v146 = vadd.s32 %v142, %v138
  %v147 = vadd.s32 %v143, %v145
  %v148 = vadd.s32 %v147, %v137
  %v149 = vadd.s32 %v148, %v139
  %v150 = vmul.u32 %v105, %v96
  %v151 = vadd.s32 %v127, %v146
  %vm152 = vc.u32 %v127, %v146
  %v153 = vadd.s32 %v149, 1
  %v154 = vsel %vm152, %v153, %v149
  %v155 = vadd.s32 %v150, %v154
  %v156 = vadd.s32 %v155, 536870912
  %v157 = vshrl.u32 %v156, 30
  %v158 = vshll.u32 %v157, 30
  %v159 = vsub.s32 %v155, %v158
  %vm160 = vcmp.lt.s32.totalorder %v159, 0
  %v161 = vsub.s32 0, %v159
  %v162 = vsel %vm160, %v161, %v159
  %v163 = vclz %v162
  %v164 = vsub.s32 %v163, 2
  %vm165 = vcmp.gt.s32.totalorder 0, %v164
  %v166 = vsel %vm165, 0, %v164
  %v167 = vsub.s32 32, %v166
  %v168 = vshll.u32 %v159, %v166
  %v169 = vshrl.u32 %v151, %v167
  %v170 = vor.u32 %v168, %v169
  %v171 = vsub.s32 4294967266, %v166
  %v172 = vadd.s32 %v171, 127
  %v173 = vshll.u32 %v172, 23
  %v174 = vor.u32 4788187, %v173
  %v175 = vand.u32 2147483647, %v174
  %v177 = vcvt.s32.f32 %v170
  %v178 = vmul.f32 %v177, %v175
  %v179 = vxor.u32 %v178, 2147483648
  %v180 = vsel %vm59, %v179, %v178
  %v181 = vsub.s32 4, %v157
  %v182 = vsel %vm59, %v181, %v157
  %v183 = vsel %vm58, %v55, %v180
  %v184 = vsel %vm58, 0, %v182
  %v185 = vmul.f32 %v183, %v183
  %v186 = vmul.f32 %v185, -0.001358992
  %v187 = vadd.f32 %v186, 0.041655596
  %v188 = vmul.f32 %v185, %v187
  %v189 = vadd.f32 %v188, -0.4999988
  %v190 = vmul.f32 %v185, %v189
  %v191 = vadd.f32 1.0, %v190
  %v192 = vmul.f32 %v183, %v183
  %v193 = vmul.f32 %v192, -0.00019511016
  %v194 = vadd.f32 %v193, 0.008332121
  %v195 = vmul.f32 %v192, %v194
  %v196 = vadd.f32 %v195, -0.16666654
  %v197 = vmul.f32 %v192, %v196
  %v198 = vadd.f32 %v197, 1.0
  %v199 = vmul.f32 %v198, %v183
  %vm200 = vweird.f32 %v55
  %v201 = vadd.s32 %v184, 3
  %v202 = vand.u32 %v201, 3
  %vm203 = vcmp.lt.s32.totalorder %v202, 2
  %vm204 = vcmp.eq.s32.totalorder %v202, 0
  %v205 = vxor.u32 %v199, 2147483648
  %v206 = vsel %vm204, %v191, %v205
  %vm207 = vcmp.eq.s32.totalorder %v202, 2
  %v208 = vxor.u32 %v191, 2147483648
  %v209 = vsel %vm207, %v208, %v199
  %v210 = vsel %vm203, %v206, %v209
  %v211 = vsel %vm200, nan, %v210
  %212 = vset.pattern.permute.xlu0 1
  %213 = vperm.xlu0 %212, %v21
  %v214 = vpop.permute.xlu0 %213
  %v216 = vmul.f32 %v214, %v211
  %vm217 = vcmask 130048
  %v218 = vsel %vm217, %v216, 0.0
  %v219 = vrot.slane %v218, 4
  %v220 = vadd.f32 %v218, %v219
  %v221 = vrot.slane %v220, 2
  %v222 = vadd.f32 %v220, %v221
  %v223 = vrot.slane %v222, 1
  %v224 = vadd.f32 %v222, %v223
  %s225 = sld [smem:[#allocation2]]
  %v226 = vstv %s225
  %v227 = vadd.f32 %v224, %v226
  %vm228 = vcmask 122880
  %229 = vst.msk [vmem:[%s4] sm:$0x1] %vm228, %v227
  // Predicated region
  $region18: #{flinear_forward.1} parent=0 // pred_check
    _
  $region19: #{flinear_forward.1} parent=0 // pred_check_branch
    %231 = sbr.rel (0) target = $region21
  $region20: #{flinear_forward.1} parent=0 // pred_region
    _
  $region21: #{flinear_forward.1} parent=0 // pred_fallthru
    _
  // Predicated region
  $region22: #{flinear_forward.1} parent=0 // pred_check
    _
  $region23: #{flinear_forward.1} parent=0 // pred_check_branch
    %233 = sbr.rel (0) target = $region25
  $region24: #{flinear_forward.1} parent=0 // pred_region
    _
  $region25: #{flinear_forward.1} parent=0 // pred_fallthru
    _

</llo_original>
